<compile_context>
chip_gen: v6e
topology: v6e:2x2x1
jax: 0.10.0
libtpu: 0.0.40
codegen_flags: <defaults>
</compile_context>

<pallas_src>
import jax
import jax.numpy as jnp
from jax.experimental import pallas as pl
from jax.experimental.pallas import tpu as pltpu


def _round_up(x, m):
    return ((x + m - 1) // m) * m


def critic_kernel(s_ref, a_ref, w1s_ref, w1a_ref, b1_ref,
                  w2_ref, b2_ref, w3_ref, b3_ref, o_ref):
    # Layer 1: fused "concat" via split-weight matmul (two MXU dots + bias).
    h1 = (jnp.dot(s_ref[...], w1s_ref[...], preferred_element_type=jnp.float32)
          + jnp.dot(a_ref[...], w1a_ref[...], preferred_element_type=jnp.float32)
          + b1_ref[...].astype(jnp.float32))
    h1 = jnp.maximum(h1, 0.0)                                   # relu(fc1)

    # Layer 2: 64x64 MXU matmul.
    h2 = (jnp.dot(h1, w2_ref[...], preferred_element_type=jnp.float32)
          + b2_ref[...].astype(jnp.float32))
    h2 = jnp.maximum(h2, 0.0)                                   # relu(fc2)

    # Output layer (64 -> 1): VPU multiply + lane reduce, then a small XLU
    # transpose so the store is a lane-dense (1, tb) row instead of (tb, 1).
    q = (jnp.sum(h2 * w3_ref[...].astype(jnp.float32), axis=-1, keepdims=True)
         + b3_ref[...].astype(jnp.float32))                     # (tb, 1)
    o_ref[...] = q.T.astype(o_ref.dtype)                        # (1, tb)


def critic_forward(state, action, params, *, block_b=2048):
    """Pallas implementation of Critic.forward(state, action). Returns [B, 1] f32."""
    w1, b1, w2, b2, w3, b3 = params

    B, Ds = state.shape
    Da = action.shape[1]
    H = w1.shape[1]

    # Split fc1 weights so the concat happens inside the kernel as two matmuls.
    w1s = w1[:Ds]                      # [Ds, H]
    w1a = w1[Ds:]                      # [Da, H]
    w3_row = w3.reshape(1, H)          # [H, 1] -> [1, H] row for the VPU reduce
    b3_2d = b3.reshape(1, 1)

    # Batch tile:
    #  * B <= 128: a single tile whose block shapes equal the full array dims.
    #  * otherwise: a multiple of 128 (keeps the lane-dense output block
    #    aligned), capped at block_b, sized for >= 2 balanced tiles (v7x 2 TCs).
    if B <= 128:
        tb = B
    else:
        half = -(-B // 2)
        tb = max(128, min(_round_up(block_b, 128), _round_up(half, 128)))
    grid = (pl.cdiv(B, tb),)

    batch_in = lambda cols: pl.BlockSpec((tb, cols), lambda i: (i, 0))
    resident = lambda shape: pl.BlockSpec(shape, lambda i: (0,) * len(shape))

    out = pl.pallas_call(
        critic_kernel,
        out_shape=jax.ShapeDtypeStruct((1, B), jnp.float32),
        grid=grid,
        in_specs=[
            batch_in(Ds),                   # state tile  (tb, Ds)
            batch_in(Da),                   # action tile (tb, Da)
            resident((Ds, H)),              # w1[:Ds]     (resident across grid)
            resident((Da, H)),              # w1[Ds:]
            resident((1, H)),               # b1
            resident((H, H)),               # w2
            resident((1, H)),               # b2
            resident((1, H)),               # w3 as a row
            resident((1, 1)),               # b3
        ],
        out_specs=pl.BlockSpec((1, tb), lambda i: (0, i)),   # lane-dense rows
        compiler_params=pltpu.CompilerParams(
            dimension_semantics=("parallel",)),
    )(state, action, w1s, w1a, b1, w2, b2, w3_row, b3_2d)

    return out.reshape(B, 1)


def init_critic_params(key, state_dim, action_dim, hidden=64):
    """Deterministic init mirroring nn.Linear's U(-1/sqrt(fan_in), 1/sqrt(fan_in))."""
    def linear(k, fan_in, fan_out):
        kw, kb = jax.random.split(k)
        bound = 1.0 / jnp.sqrt(jnp.float32(fan_in))
        w = jax.random.uniform(kw, (fan_in, fan_out), jnp.float32, -bound, bound)
        b = jax.random.uniform(kb, (1, fan_out), jnp.float32, -bound, bound)
        return w, b

    k1, k2, k3 = jax.random.split(key, 3)
    w1, b1 = linear(k1, state_dim + action_dim, hidden)
    w2, b2 = linear(k2, hidden, hidden)
    w3, b3 = linear(k3, hidden, 1)
    return (w1, b1, w2, b2, w3, b3)


def critic_reference(state, action, params):
    """Plain-JAX reference (mirrors the PyTorch forward) for verification."""
    w1, b1, w2, b2, w3, b3 = params
    x = jnp.concatenate([state, action], axis=1)
    x = jnp.maximum(x @ w1 + b1, 0.0)
    x = jnp.maximum(x @ w2 + b2, 0.0)
    return x @ w3 + b3


if __name__ == "__main__":
    key = jax.random.PRNGKey(0)
    k_params, k_state, k_action = jax.random.split(key, 3)

    batch, state_dim, action_dim = 8, 6, 2
    params = init_critic_params(k_params, state_dim, action_dim)

    state = jax.random.normal(k_state, (batch, state_dim), jnp.float32)
    action = jax.random.normal(k_action, (batch, action_dim), jnp.float32)

    out = critic_forward(state, action, params)
    out = jax.block_until_ready(out)

    ref = critic_reference(state, action, params)
    assert out.shape == (batch, 1), out.shape
    assert jnp.allclose(out, ref, atol=1e-5, rtol=1e-5), (out, ref)

    # Also exercise the gridded path with a ragged (masked) last tile.
    big_b = 1037
    ks, ka = jax.random.split(jax.random.PRNGKey(1))
    big_state = jax.random.normal(ks, (big_b, state_dim), jnp.float32)
    big_action = jax.random.normal(ka, (big_b, action_dim), jnp.float32)
    big_out = jax.block_until_ready(critic_forward(big_state, big_action, params))
    big_ref = critic_reference(big_state, big_action, params)
    assert big_out.shape == (big_b, 1), big_out.shape
    assert jnp.allclose(big_out, big_ref, atol=1e-4, rtol=1e-4)

    print("KERNEL_OK")
</pallas_src>

<mosaic_0001>
module attributes {stable_mosaic.version = 11 : i64} {
  func.func @critic_kernel(%arg0: i32, %arg1: memref<8x6xf32, #tpu.memory_space<vmem>>, %arg2: memref<8x2xf32, #tpu.memory_space<vmem>>, %arg3: memref<6x64xf32, #tpu.memory_space<vmem>>, %arg4: memref<2x64xf32, #tpu.memory_space<vmem>>, %arg5: memref<1x64xf32, #tpu.memory_space<vmem>>, %arg6: memref<64x64xf32, #tpu.memory_space<vmem>>, %arg7: memref<1x64xf32, #tpu.memory_space<vmem>>, %arg8: memref<1x64xf32, #tpu.memory_space<vmem>>, %arg9: memref<1x1xf32, #tpu.memory_space<vmem>>, %arg10: memref<1x8xf32, #tpu.memory_space<vmem>>) attributes {dimension_semantics = [#tpu.dimension_semantics<parallel>], iteration_bounds = array<i64: 1>, scalar_prefetch = 0 : i64, scratch_operands = 0 : i64, tpu.core_type = #tpu.core_type<tc>, window_params = [{transform_indices = @transform_0, window_bounds = array<i64: 8, 6>}, {transform_indices = @transform_1, window_bounds = array<i64: 8, 2>}, {pipeline_mode = #tpu.pipeline_mode<synchronous>, transform_indices = @transform_2, window_bounds = array<i64: 6, 64>}, {pipeline_mode = #tpu.pipeline_mode<synchronous>, transform_indices = @transform_3, window_bounds = array<i64: 2, 64>}, {pipeline_mode = #tpu.pipeline_mode<synchronous>, transform_indices = @transform_4, window_bounds = array<i64: 1, 64>}, {pipeline_mode = #tpu.pipeline_mode<synchronous>, transform_indices = @transform_5, window_bounds = array<i64: 64, 64>}, {pipeline_mode = #tpu.pipeline_mode<synchronous>, transform_indices = @transform_6, window_bounds = array<i64: 1, 64>}, {pipeline_mode = #tpu.pipeline_mode<synchronous>, transform_indices = @transform_7, window_bounds = array<i64: 1, 64>}, {pipeline_mode = #tpu.pipeline_mode<synchronous>, transform_indices = @transform_8, window_bounds = array<i64: 1, 1>}, {transform_indices = @transform_9, window_bounds = array<i64: 1, 8>}]} {
    %c0 = arith.constant 0 : index
    %c0_0 = arith.constant 0 : index
    %0 = vector.load %arg1[%c0, %c0_0] : memref<8x6xf32, #tpu.memory_space<vmem>>, vector<8x6xf32>
    %c0_1 = arith.constant 0 : index
    %c0_2 = arith.constant 0 : index
    %1 = vector.load %arg3[%c0_1, %c0_2] : memref<6x64xf32, #tpu.memory_space<vmem>>, vector<6x64xf32>
    %cst = arith.constant dense<0.000000e+00> : vector<8x64xf32>
    %2 = tpu.matmul %0, %1, %cst {dimension_numbers = #tpu.dot_dimension_numbers<[1], [0], [0], [1], [0, 0, 1, 1], [], []>} : vector<8x6xf32>, vector<6x64xf32>, vector<8x64xf32> -> vector<8x64xf32>
    %c0_3 = arith.constant 0 : index
    %c0_4 = arith.constant 0 : index
    %3 = vector.load %arg2[%c0_3, %c0_4] : memref<8x2xf32, #tpu.memory_space<vmem>>, vector<8x2xf32>
    %c0_5 = arith.constant 0 : index
    %c0_6 = arith.constant 0 : index
    %4 = vector.load %arg4[%c0_5, %c0_6] : memref<2x64xf32, #tpu.memory_space<vmem>>, vector<2x64xf32>
    %cst_7 = arith.constant dense<0.000000e+00> : vector<8x64xf32>
    %5 = tpu.matmul %3, %4, %cst_7 {dimension_numbers = #tpu.dot_dimension_numbers<[1], [0], [0], [1], [0, 0, 1, 1], [], []>} : vector<8x2xf32>, vector<2x64xf32>, vector<8x64xf32> -> vector<8x64xf32>
    %6 = arith.addf %2, %5 : vector<8x64xf32>
    %c0_8 = arith.constant 0 : index
    %c0_9 = arith.constant 0 : index
    %7 = vector.load %arg5[%c0_8, %c0_9] : memref<1x64xf32, #tpu.memory_space<vmem>>, vector<1x64xf32>
    %8 = vector.broadcast %7 : vector<1x64xf32> to vector<8x64xf32>
    %9 = arith.addf %6, %8 : vector<8x64xf32>
    %cst_10 = arith.constant 0.000000e+00 : f32
    %10 = vector.broadcast %cst_10 : f32 to vector<8x64xf32>
    %11 = arith.maximumf %9, %10 : vector<8x64xf32>
    %c0_11 = arith.constant 0 : index
    %c0_12 = arith.constant 0 : index
    %12 = vector.load %arg6[%c0_11, %c0_12] : memref<64x64xf32, #tpu.memory_space<vmem>>, vector<64x64xf32>
    %cst_13 = arith.constant dense<0.000000e+00> : vector<8x64xf32>
    %13 = tpu.matmul %11, %12, %cst_13 {dimension_numbers = #tpu.dot_dimension_numbers<[1], [0], [0], [1], [0, 0, 1, 1], [], []>} : vector<8x64xf32>, vector<64x64xf32>, vector<8x64xf32> -> vector<8x64xf32>
    %c0_14 = arith.constant 0 : index
    %c0_15 = arith.constant 0 : index
    %14 = vector.load %arg7[%c0_14, %c0_15] : memref<1x64xf32, #tpu.memory_space<vmem>>, vector<1x64xf32>
    %15 = vector.broadcast %14 : vector<1x64xf32> to vector<8x64xf32>
    %16 = arith.addf %13, %15 : vector<8x64xf32>
    %cst_16 = arith.constant 0.000000e+00 : f32
    %17 = vector.broadcast %cst_16 : f32 to vector<8x64xf32>
    %18 = arith.maximumf %16, %17 : vector<8x64xf32>
    %c0_17 = arith.constant 0 : index
    %c0_18 = arith.constant 0 : index
    %19 = vector.load %arg8[%c0_17, %c0_18] : memref<1x64xf32, #tpu.memory_space<vmem>>, vector<1x64xf32>
    %20 = vector.broadcast %19 : vector<1x64xf32> to vector<8x64xf32>
    %21 = arith.mulf %18, %20 : vector<8x64xf32>
    %cst_19 = arith.constant dense<0.000000e+00> : vector<8xf32>
    %22 = vector.multi_reduction <add>, %21, %cst_19 [1] : vector<8x64xf32> to vector<8xf32>
    %23 = vector.shape_cast %22 : vector<8xf32> to vector<8x1xf32>
    %c0_20 = arith.constant 0 : index
    %c0_21 = arith.constant 0 : index
    %24 = vector.load %arg9[%c0_20, %c0_21] : memref<1x1xf32, #tpu.memory_space<vmem>>, vector<1x1xf32>
    %25 = vector.broadcast %24 : vector<1x1xf32> to vector<8x1xf32>
    %26 = arith.addf %23, %25 : vector<8x1xf32>
    %27 = tpu.transpose %26, [1, 0] : vector<8x1xf32> -> vector<1x8xf32>
    %c0_22 = arith.constant 0 : index
    %c0_23 = arith.constant 0 : index
    %28 = vector.load %arg10[%c0_22, %c0_23] : memref<1x8xf32, #tpu.memory_space<vmem>>, vector<1x8xf32>
    tpu.vector_store %arg10[%c0_22, %c0_23], %27 {strides = array<i32>} : memref<1x8xf32, #tpu.memory_space<vmem>>, vector<1x8xf32>,
    return
  }
  func.func @transform_0(%arg0: i32) -> (i32, i32) {
    %c0_i32 = arith.constant 0 : i32
    %c0_i32_0 = arith.constant 0 : i32
    return %arg0, %c0_i32 : i32, i32
  }
  func.func @transform_1(%arg0: i32) -> (i32, i32) {
    %c0_i32 = arith.constant 0 : i32
    %c0_i32_0 = arith.constant 0 : i32
    return %arg0, %c0_i32 : i32, i32
  }
  func.func @transform_2(%arg0: i32) -> (i32, i32) {
    %c0_i32 = arith.constant 0 : i32
    %c0_i32_0 = arith.constant 0 : i32
    %c0_i32_1 = arith.constant 0 : i32
    return %c0_i32, %c0_i32_0 : i32, i32
  }
  func.func @transform_3(%arg0: i32) -> (i32, i32) {
    %c0_i32 = arith.constant 0 : i32
    %c0_i32_0 = arith.constant 0 : i32
    %c0_i32_1 = arith.constant 0 : i32
    return %c0_i32, %c0_i32_0 : i32, i32
  }
  func.func @transform_4(%arg0: i32) -> (i32, i32) {
    %c0_i32 = arith.constant 0 : i32
    %c0_i32_0 = arith.constant 0 : i32
    %c0_i32_1 = arith.constant 0 : i32
    return %c0_i32, %c0_i32_0 : i32, i32
  }
  func.func @transform_5(%arg0: i32) -> (i32, i32) {
    %c0_i32 = arith.constant 0 : i32
    %c0_i32_0 = arith.constant 0 : i32
    %c0_i32_1 = arith.constant 0 : i32
    return %c0_i32, %c0_i32_0 : i32, i32
  }
  func.func @transform_6(%arg0: i32) -> (i32, i32) {
    %c0_i32 = arith.constant 0 : i32
    %c0_i32_0 = arith.constant 0 : i32
    %c0_i32_1 = arith.constant 0 : i32
    return %c0_i32, %c0_i32_0 : i32, i32
  }
  func.func @transform_7(%arg0: i32) -> (i32, i32) {
    %c0_i32 = arith.constant 0 : i32
    %c0_i32_0 = arith.constant 0 : i32
    %c0_i32_1 = arith.constant 0 : i32
    return %c0_i32, %c0_i32_0 : i32, i32
  }
  func.func @transform_8(%arg0: i32) -> (i32, i32) {
    %c0_i32 = arith.constant 0 : i32
    %c0_i32_0 = arith.constant 0 : i32
    %c0_i32_1 = arith.constant 0 : i32
    return %c0_i32, %c0_i32_0 : i32, i32
  }
  func.func @transform_9(%arg0: i32) -> (i32, i32) {
    %c0_i32 = arith.constant 0 : i32
    %c0_i32_0 = arith.constant 0 : i32
    return %c0_i32, %arg0 : i32, i32
  }
}

</mosaic_0001>

<llo_original>
// kernel: tpu_custom_call.1
$region0: #{tpu_custom_call.1}
  #allocation0 [shape = 'u32[]', space=smem, size = 0x4, offset = 0x4, fixed_abs, tag = 'smem constant byte address 0x4 - core index']
  #allocation1 [shape = 'u32[144,128]{1,0:T(1,128)}', space=vmem, size = 0x12000, scoped, tag = 'internal scratch']
  #allocation2 [shape = 'f32[1,1]{1,0:T(1,128)S(1)}', space=vmem, size = 0x200, scoped, tag = 'scoped memory for tpu_custom_call.1']
  %s0 = inlined_call_operand.vmem [shape: f32[8,6], index: 0, kind: input, shape index: {}]
  %s1 = inlined_call_operand.vmem [shape: f32[8,2], index: 1, kind: input, shape index: {}]
  %s2 = inlined_call_operand.hbm [shape: f32[6,64], index: 2, kind: input, shape index: {}]
  %s3 = inlined_call_operand.vmem [shape: f32[2,64], index: 3, kind: input, shape index: {}]
  %s4 = inlined_call_operand.vmem [shape: f32[1,64], index: 4, kind: input, shape index: {}]
  %s5 = inlined_call_operand.hbm [shape: f32[64,64], index: 5, kind: input, shape index: {}]
  %s6 = inlined_call_operand.vmem [shape: f32[1,64], index: 6, kind: input, shape index: {}]
  %s7 = inlined_call_operand.vmem [shape: f32[1,64], index: 7, kind: input, shape index: {}]
  %s8 = inlined_call_operand.<no memory space> [shape: f32[1,1], index: 8, kind: input, shape index: {}]
  %s9 = inlined_call_operand.hbm [shape: f32[1,8], index: 9, kind: output, shape index: {}]
  %s10 = sld [smem:[#allocation0]]
  $region54: #{tpu_custom_call.1} parent=0
    _
  %s12 = ssub.s32 1, %s10
  %s13 = scalar_select 0, %s12, %s10
  %v14 = vstv %s8
  %15 = vst [vmem:[#allocation2] sm:$0x1] %v14
  $region1: #{tpu_custom_call.1} parent=0
    #allocation3 [shape = 'u8[4096]{0}', space=vmem, size = 0x1000, scoped, tag = 'input window, operand 2, single buffered']
    #allocation4 [shape = 's32[1]{0}', space=sflag, size = 0x4, scoped, tag = 'scoped memory for tpu_custom_call.1']
    #allocation5 [shape = 's32[1]{0}', space=sflag, size = 0x4, scoped, tag = 'scoped memory for tpu_custom_call.1']
    #allocation6 [shape = 'u8[32768]{0}', space=vmem, size = 0x8000, scoped, tag = 'input window, operand 5, single buffered']
    #allocation7 [shape = 's32[1]{0}', space=sflag, size = 0x4, scoped, tag = 'scoped memory for tpu_custom_call.1']
    #allocation8 [shape = 'u8[512]{0}', space=vmem, size = 0x400, scoped, tag = 'output window, operand 0, single buffered']
    %16 = vsyncpa [#allocation4], 0
    %17 = vsyncpa [#allocation7], 0
    %18 = vsyncpa [#allocation5], 0
    // Predicated region
    $region2: #{tpu_custom_call.1} parent=1 // pred_check
      _
    $region3: #{tpu_custom_call.1} parent=1 // pred_check_branch
      %20 = sbr.rel (0) target = $region5
    $region4: #{tpu_custom_call.1} parent=1 // pred_region
      _
    $region5: #{tpu_custom_call.1} parent=1 // pred_fallthru
      _
    // Predicated region
    $region6: #{tpu_custom_call.1} parent=1 // pred_check
      _
    $region7: #{tpu_custom_call.1} parent=1 // pred_check_branch
      %22 = sbr.rel (0) target = $region9
    $region8: #{tpu_custom_call.1} parent=1 // pred_region
      _
    $region9: #{tpu_custom_call.1} parent=1 // pred_fallthru
      _
    // Predicated region
    $region10: #{tpu_custom_call.1} parent=1 // pred_check
      _
    $region11: #{tpu_custom_call.1} parent=1 // pred_check_branch
      %24 = sbr.rel (0) target = $region13
    $region12: #{tpu_custom_call.1} parent=1 // pred_region
      %s26 = ssub.s32 128, 128
      %27 = vsyncadd [#allocation4], %s26
      %s29 = sshll.u32 [#allocation3], 4
      %s30 = int_to_ptr.vmem [resolvable:$true] %s29
      %32 = dma.hbm_to_vmem [thread:$0]  %s2, 128, %s30, [#allocation4]
    $region13: #{tpu_custom_call.1} parent=1 // pred_fallthru
      _
    // Predicated region
    $region14: #{tpu_custom_call.1} parent=1 // pred_check
      _
    $region15: #{tpu_custom_call.1} parent=1 // pred_check_branch
      %34 = sbr.rel (0) target = $region17
    $region16: #{tpu_custom_call.1} parent=1 // pred_region
      _
    $region17: #{tpu_custom_call.1} parent=1 // pred_fallthru
      _
    // Predicated region
    $region18: #{tpu_custom_call.1} parent=1 // pred_check
      _
    $region19: #{tpu_custom_call.1} parent=1 // pred_check_branch
      %36 = sbr.rel (0) target = $region21
    $region20: #{tpu_custom_call.1} parent=1 // pred_region
      _
    $region21: #{tpu_custom_call.1} parent=1 // pred_fallthru
      _
    // Predicated region
    $region22: #{tpu_custom_call.1} parent=1 // pred_check
      _
    $region23: #{tpu_custom_call.1} parent=1 // pred_check_branch
      %38 = sbr.rel (0) target = $region25
    $region24: #{tpu_custom_call.1} parent=1 // pred_region
      %s40 = ssub.s32 1024, 1024
      %41 = vsyncadd [#allocation7], %s40
      %s42 = sshll.u32 [#allocation6], 4
      %s43 = int_to_ptr.vmem [resolvable:$true] %s42
      %48 = dma.hbm_to_vmem [thread:$0]  %s5, 1024, %s43, [#allocation7], 128, 128, 8
    $region25: #{tpu_custom_call.1} parent=1 // pred_fallthru
      _
    // Predicated region
    $region26: #{tpu_custom_call.1} parent=1 // pred_check
      _
    $region27: #{tpu_custom_call.1} parent=1 // pred_check_branch
      %50 = sbr.rel (0) target = $region29
    $region28: #{tpu_custom_call.1} parent=1 // pred_region
      _
    $region29: #{tpu_custom_call.1} parent=1 // pred_fallthru
      _
    // Predicated region
    $region30: #{tpu_custom_call.1} parent=1 // pred_check
      _
    $region31: #{tpu_custom_call.1} parent=1 // pred_check_branch
      %52 = sbr.rel (0) target = $region33
    $region32: #{tpu_custom_call.1} parent=1 // pred_region
      _
    $region33: #{tpu_custom_call.1} parent=1 // pred_fallthru
      _
    // Predicated region
    $region34: #{tpu_custom_call.1} parent=1 // pred_check
      _
    $region35: #{tpu_custom_call.1} parent=1 // pred_check_branch
      %54 = sbr.rel (0) target = $region37
    $region36: #{tpu_custom_call.1} parent=1 // pred_region
      _
    $region37: #{tpu_custom_call.1} parent=1 // pred_fallthru
      _
    // Predicated region
    $region38: #{tpu_custom_call.1} parent=1 // pred_check
      _
    $region39: #{tpu_custom_call.1} parent=1 // pred_check_branch
      %56 = sbr.rel (0) target = $region41
    $region40: #{tpu_custom_call.1} parent=1 // pred_region
      %57 = dma.done [#allocation4], 128
    $region41: #{tpu_custom_call.1} parent=1 // pred_fallthru
      _
    // Predicated region
    $region42: #{tpu_custom_call.1} parent=1 // pred_check
      _
    $region43: #{tpu_custom_call.1} parent=1 // pred_check_branch
      %59 = sbr.rel (0) target = $region45
    $region44: #{tpu_custom_call.1} parent=1 // pred_region
      %60 = dma.done [#allocation7], 1024
    $region45: #{tpu_custom_call.1} parent=1 // pred_fallthru
      _
    %v61 = vld [vmem:[%s0] sm:$0xff]
    %v62 = vld [vmem:[#allocation3] sm:$0x3f]
    %v63 = vld [vmem:[%s1] sm:$0xff]
    %v64 = vld [vmem:[%s3] sm:$0x3]
    %vm65 = vcmask 15360
    %v67 = vsel %vm65, %v63, 0
    %vm69 = vcmask 1041408
    %v71 = vsel %vm69, %v64, 0
    %73 = vmatprep.subr.mxu0 0.0
    %74 = vmatpush1.msra.mxu0 0.0
    %75 = vmatprep.subr.mxu0 0.0
    %76 = vmatpush1.msra.mxu0 0.0
    %77 = vmatprep.subr.mxu0 0.0
    %78 = vmatpush1.msra.mxu0 0.0
    %79 = vmatprep.subr.mxu0 0.0
    %80 = vmatpush1.msra.mxu0 0.0
    %81 = vmatprep.subr.mxu0 0.0
    %82 = vmatpush1.msra.mxu0 0.0
    %83 = vmatprep.subr.mxu0 0.0
    %84 = vmatpush1.msra.mxu0 0.0
    %85 = vmatprep.subr.mxu0 0.0
    %86 = vmatpush1.msra.mxu0 0.0
    %87 = vmatprep.subr.mxu0 0.0
    %88 = vmatpush1.msra.mxu0 0.0
    %89 = vmatprep.subr.mxu0 0.0
    %90 = vmatpush1.msra.mxu0 0.0
    %91 = vmatprep.subr.mxu0 0.0
    %92 = vmatpush1.msra.mxu0 0.0
    %93 = vmatprep.subr.mxu0 0.0
    %94 = vmatpush1.msra.mxu0 0.0
    %95 = vmatprep.subr.mxu0 0.0
    %96 = vmatpush1.msra.mxu0 0.0
    %97 = vmatprep.subr.mxu0 0.0
    %98 = vmatpush1.msra.mxu0 0.0
    %99 = vmatprep.subr.mxu0 0.0
    %100 = vmatpush1.msra.mxu0 0.0
    %101 = vmatprep.subr.mxu0 0.0
    %102 = vmatpush1.msra.mxu0 0.0
    %103 = vmatprep.subr.mxu0 0.0
    %104 = vmatpush1.msra.mxu0 %v71
    %105 = vmatprep.subr.mxu0 0.0
    %106 = vmatpush2.msra.mxu0 0.0
    %107 = vmatprep.subr.mxu0 0.0
    %108 = vmatpush2.msra.mxu0 0.0
    %109 = vmatprep.subr.mxu0 0.0
    %110 = vmatpush2.msra.mxu0 0.0
    %111 = vmatprep.subr.mxu0 0.0
    %112 = vmatpush2.msra.mxu0 0.0
    %113 = vmatprep.subr.mxu0 0.0
    %114 = vmatpush2.msra.mxu0 0.0
    %115 = vmatprep.subr.mxu0 0.0
    %116 = vmatpush2.msra.mxu0 0.0
    %117 = vmatprep.subr.mxu0 0.0
    %118 = vmatpush2.msra.mxu0 0.0
    %119 = vmatprep.subr.mxu0 0.0
    %120 = vmatpush2.msra.mxu0 0.0
    %121 = vmatprep.subr.mxu0 0.0
    %122 = vmatpush2.msra.mxu0 0.0
    %123 = vmatprep.subr.mxu0 0.0
    %124 = vmatpush2.msra.mxu0 0.0
    %125 = vmatprep.subr.mxu0 0.0
    %126 = vmatpush2.msra.mxu0 0.0
    %127 = vmatprep.subr.mxu0 0.0
    %128 = vmatpush2.msra.mxu0 0.0
    %129 = vmatprep.subr.mxu0 0.0
    %130 = vmatpush2.msra.mxu0 0.0
    %131 = vmatprep.subr.mxu0 0.0
    %132 = vmatpush2.msra.mxu0 0.0
    %133 = vmatprep.subr.mxu0 0.0
    %134 = vmatpush2.msra.mxu0 0.0
    %135 = vmatprep.subr.mxu0 0.0
    %136 = vmatpush2.msra.mxu0 0.0
    %137 = vmatprep.mubr.f32.mxu0 0.0
    %138 = vmatmul.mubr.f32.gmra.mxu0 %v67
    %v139 = vpop.f32.mrf.mxu0
    %v140 = vadd.f32 0.0, %v139
    %v141 = vpop.f32.mrf.mxu0
    %142 = vdwg.mxu0
    %vm143 = vcmask 48128
    %v145 = vsel %vm143, %v61, 0
    %vm147 = vcmask 1045504
    %v149 = vsel %vm147, %v62, 0
    %151 = vmatprep.subr.mxu0 0.0
    %152 = vmatpush1.msra.mxu0 0.0
    %153 = vmatprep.subr.mxu0 0.0
    %154 = vmatpush1.msra.mxu0 0.0
    %155 = vmatprep.subr.mxu0 0.0
    %156 = vmatpush1.msra.mxu0 0.0
    %157 = vmatprep.subr.mxu0 0.0
    %158 = vmatpush1.msra.mxu0 0.0
    %159 = vmatprep.subr.mxu0 0.0
    %160 = vmatpush1.msra.mxu0 0.0
    %161 = vmatprep.subr.mxu0 0.0
    %162 = vmatpush1.msra.mxu0 0.0
    %163 = vmatprep.subr.mxu0 0.0
    %164 = vmatpush1.msra.mxu0 0.0
    %165 = vmatprep.subr.mxu0 0.0
    %166 = vmatpush1.msra.mxu0 0.0
    %167 = vmatprep.subr.mxu0 0.0
    %168 = vmatpush1.msra.mxu0 0.0
    %169 = vmatprep.subr.mxu0 0.0
    %170 = vmatpush1.msra.mxu0 0.0
    %171 = vmatprep.subr.mxu0 0.0
    %172 = vmatpush1.msra.mxu0 0.0
    %173 = vmatprep.subr.mxu0 0.0
    %174 = vmatpush1.msra.mxu0 0.0
    %175 = vmatprep.subr.mxu0 0.0
    %176 = vmatpush1.msra.mxu0 0.0
    %177 = vmatprep.subr.mxu0 0.0
    %178 = vmatpush1.msra.mxu0 0.0
    %179 = vmatprep.subr.mxu0 0.0
    %180 = vmatpush1.msra.mxu0 0.0
    %181 = vmatprep.subr.mxu0 0.0
    %182 = vmatpush1.msra.mxu0 %v149
    %183 = vmatprep.subr.mxu0 0.0
    %184 = vmatpush2.msra.mxu0 0.0
    %185 = vmatprep.subr.mxu0 0.0
    %186 = vmatpush2.msra.mxu0 0.0
    %187 = vmatprep.subr.mxu0 0.0
    %188 = vmatpush2.msra.mxu0 0.0
    %189 = vmatprep.subr.mxu0 0.0
    %190 = vmatpush2.msra.mxu0 0.0
    %191 = vmatprep.subr.mxu0 0.0
    %192 = vmatpush2.msra.mxu0 0.0
    %193 = vmatprep.subr.mxu0 0.0
    %194 = vmatpush2.msra.mxu0 0.0
    %195 = vmatprep.subr.mxu0 0.0
    %196 = vmatpush2.msra.mxu0 0.0
    %197 = vmatprep.subr.mxu0 0.0
    %198 = vmatpush2.msra.mxu0 0.0
    %199 = vmatprep.subr.mxu0 0.0
    %200 = vmatpush2.msra.mxu0 0.0
    %201 = vmatprep.subr.mxu0 0.0
    %202 = vmatpush2.msra.mxu0 0.0
    %203 = vmatprep.subr.mxu0 0.0
    %204 = vmatpush2.msra.mxu0 0.0
    %205 = vmatprep.subr.mxu0 0.0
    %206 = vmatpush2.msra.mxu0 0.0
    %207 = vmatprep.subr.mxu0 0.0
    %208 = vmatpush2.msra.mxu0 0.0
    %209 = vmatprep.subr.mxu0 0.0
    %210 = vmatpush2.msra.mxu0 0.0
    %211 = vmatprep.subr.mxu0 0.0
    %212 = vmatpush2.msra.mxu0 0.0
    %213 = vmatprep.subr.mxu0 0.0
    %214 = vmatpush2.msra.mxu0 0.0
    %215 = vmatprep.mubr.f32.mxu0 0.0
    %216 = vmatmul.mubr.f32.gmra.mxu0 %v145
    %v217 = vpop.f32.mrf.mxu0
    %v218 = vadd.f32 %v140, %v217
    %v219 = vpop.f32.mrf.mxu0
    %220 = vdwg.mxu0
    %v221 = vld [vmem:[%s4] sm:$0x1]
    %v223 = vlaneseq
    %v224 = vshrl.u32 %v223, 7
    %v225 = vsub.s32 0, %v224
    %v226 = vrot.slane %v221, %v225
    %v228 = vadd.f32 %v218, %v226
    %v229 = vmax.f32 %v228, 0.0
    %v230 = vld [vmem:[#allocation6] sm:$0xff]
    %v231 = vld [vmem:[#allocation6 + $0x8] sm:$0xff]
    %v232 = vld [vmem:[#allocation6 + $0x10] sm:$0xff]
    %v233 = vld [vmem:[#allocation6 + $0x18] sm:$0xff]
    %v234 = vld [vmem:[#allocation6 + $0x20] sm:$0xff]
    %v235 = vld [vmem:[#allocation6 + $0x28] sm:$0xff]
    %v236 = vld [vmem:[#allocation6 + $0x30] sm:$0xff]
    %v237 = vld [vmem:[#allocation6 + $0x38] sm:$0xff]
    %v238 = vld [vmem:[%s6] sm:$0x1]
    %v240 = vlaneseq
    %v241 = vshrl.u32 %v240, 7
    %v242 = vsub.s32 0, %v241
    %v243 = vrot.slane %v238, %v242
    %vm245 = vcmask 523264
    %v247 = vsel %vm245, %v229, 0
    %249 = vmatprep.subr.mxu0 0.0
    %250 = vmatpush1.msra.mxu0 0.0
    %251 = vmatprep.subr.mxu0 0.0
    %252 = vmatpush1.msra.mxu0 0.0
    %253 = vmatprep.subr.mxu0 0.0
    %254 = vmatpush1.msra.mxu0 0.0
    %255 = vmatprep.subr.mxu0 0.0
    %256 = vmatpush1.msra.mxu0 0.0
    %257 = vmatprep.subr.mxu0 0.0
    %258 = vmatpush1.msra.mxu0 0.0
    %259 = vmatprep.subr.mxu0 0.0
    %260 = vmatpush1.msra.mxu0 0.0
    %261 = vmatprep.subr.mxu0 0.0
    %262 = vmatpush1.msra.mxu0 0.0
    %263 = vmatprep.subr.mxu0 0.0
    %264 = vmatpush1.msra.mxu0 0.0
    %265 = vmatprep.subr.mxu0 0.0
    %266 = vmatpush1.msra.mxu0 %v237
    %267 = vmatprep.subr.mxu0 0.0
    %268 = vmatpush1.msra.mxu0 %v236
    %269 = vmatprep.subr.mxu0 0.0
    %270 = vmatpush1.msra.mxu0 %v235
    %271 = vmatprep.subr.mxu0 0.0
    %272 = vmatpush1.msra.mxu0 %v234
    %273 = vmatprep.subr.mxu0 0.0
    %274 = vmatpush1.msra.mxu0 %v233
    %275 = vmatprep.subr.mxu0 0.0
    %276 = vmatpush1.msra.mxu0 %v232
    %277 = vmatprep.subr.mxu0 0.0
    %278 = vmatpush1.msra.mxu0 %v231
    %279 = vmatprep.subr.mxu0 0.0
    %280 = vmatpush1.msra.mxu0 %v230
    %281 = vmatprep.subr.mxu0 0.0
    %282 = vmatpush2.msra.mxu0 0.0
    %283 = vmatprep.subr.mxu0 0.0
    %284 = vmatpush2.msra.mxu0 0.0
    %285 = vmatprep.subr.mxu0 0.0
    %286 = vmatpush2.msra.mxu0 0.0
    %287 = vmatprep.subr.mxu0 0.0
    %288 = vmatpush2.msra.mxu0 0.0
    %289 = vmatprep.subr.mxu0 0.0
    %290 = vmatpush2.msra.mxu0 0.0
    %291 = vmatprep.subr.mxu0 0.0
    %292 = vmatpush2.msra.mxu0 0.0
    %293 = vmatprep.subr.mxu0 0.0
    %294 = vmatpush2.msra.mxu0 0.0
    %295 = vmatprep.subr.mxu0 0.0
    %296 = vmatpush2.msra.mxu0 0.0
    %297 = vmatprep.subr.mxu0 0.0
    %298 = vmatpush2.msra.mxu0 0.0
    %299 = vmatprep.subr.mxu0 0.0
    %300 = vmatpush2.msra.mxu0 0.0
    %301 = vmatprep.subr.mxu0 0.0
    %302 = vmatpush2.msra.mxu0 0.0
    %303 = vmatprep.subr.mxu0 0.0
    %304 = vmatpush2.msra.mxu0 0.0
    %305 = vmatprep.subr.mxu0 0.0
    %306 = vmatpush2.msra.mxu0 0.0
    %307 = vmatprep.subr.mxu0 0.0
    %308 = vmatpush2.msra.mxu0 0.0
    %309 = vmatprep.subr.mxu0 0.0
    %310 = vmatpush2.msra.mxu0 0.0
    %311 = vmatprep.subr.mxu0 0.0
    %312 = vmatpush2.msra.mxu0 0.0
    %313 = vmatprep.mubr.f32.mxu0 0.0
    %314 = vmatmul.mubr.f32.gmra.mxu0 %v247
    %v315 = vpop.f32.mrf.mxu0
    %v316 = vadd.f32 %v243, %v315
    %v317 = vpop.f32.mrf.mxu0
    %318 = vdwg.mxu0
    %v319 = vmax.f32 %v316, 0.0
    %v320 = vld [vmem:[%s7] sm:$0x1]
    %v322 = vlaneseq
    %v323 = vshrl.u32 %v322, 7
    %v324 = vsub.s32 0, %v323
    %v325 = vrot.slane %v320, %v324
    %v327 = vmul.f32 %v319, %v325
    %v328 = vsel %vm245, %v327, 0.0
    %329 = vadd.xlane.f32.xlu0 %v328
    %v330 = vpop.xlane.xlu0 %329
    %v331 = vld [vmem:[#allocation2] sm:$0x1]
    %v333 = vlaneseq
    %v334 = vshrl.u32 %v333, 7
    %v335 = vsub.s32 0, %v334
    %v336 = vrot.slane %v331, %v335
    %v338 = vadd.f32 %v330, %v336
    %339 = vxpose.xlu0.b32.start [1/16] %v338, 128
    %340 = vxpose.xlu0.b32.cont [2/16] 0.0, 128
    %341 = vxpose.xlu0.b32.cont [3/16] 0.0, 128
    %342 = vxpose.xlu0.b32.cont [4/16] 0.0, 128
    %343 = vxpose.xlu0.b32.cont [5/16] 0.0, 128
    %344 = vxpose.xlu0.b32.cont [6/16] 0.0, 128
    %345 = vxpose.xlu0.b32.cont [7/16] 0.0, 128
    %346 = vxpose.xlu0.b32.cont [8/16] 0.0, 128
    %347 = vxpose.xlu0.b32.cont [9/16] 0.0, 128
    %348 = vxpose.xlu0.b32.cont [10/16] 0.0, 128
    %349 = vxpose.xlu0.b32.cont [11/16] 0.0, 128
    %350 = vxpose.xlu0.b32.cont [12/16] 0.0, 128
    %351 = vxpose.xlu0.b32.cont [13/16] 0.0, 128
    %352 = vxpose.xlu0.b32.cont [14/16] 0.0, 128
    %353 = vxpose.xlu0.b32.cont [15/16] 0.0, 128
    %354 = vxpose.xlu0.b32.end [16/16] 0.0, 128
    %v355 = vpop.trf.xlu0
    %v356 = vpop.trf.xlu0
    %v357 = vpop.trf.xlu0
    %v358 = vpop.trf.xlu0
    %v359 = vpop.trf.xlu0
    %v360 = vpop.trf.xlu0
    %v361 = vpop.trf.xlu0
    %v362 = vpop.trf.xlu0
    %v363 = vpop.trf.xlu0
    %v364 = vpop.trf.xlu0
    %v365 = vpop.trf.xlu0
    %v366 = vpop.trf.xlu0
    %v367 = vpop.trf.xlu0
    %v368 = vpop.trf.xlu0
    %v369 = vpop.trf.xlu0
    %v370 = vpop.trf.xlu0
    %vm371 = vcmask 57344
    %372 = vst.msk [vmem:[#allocation8] sm:$0x1] %vm371, %v355
    // Predicated region
    $region46: #{tpu_custom_call.1} parent=1 // pred_check
      _
    $region47: #{tpu_custom_call.1} parent=1 // pred_check_branch
      %374 = sbr.rel (0) target = $region49
    $region48: #{tpu_custom_call.1} parent=1 // pred_region
      %s376 = ssub.s32 16, 16
      %377 = vsyncadd [#allocation5], %s376
      %s379 = sshll.u32 [#allocation8], 4
      %s380 = int_to_ptr.vmem [resolvable:$true] %s379
      %382 = dma.vmem_to_hbm [thread:$0]  %s380, 16, %s9, [#allocation5]
    $region49: #{tpu_custom_call.1} parent=1 // pred_fallthru
      _
    // Predicated region
    $region50: #{tpu_custom_call.1} parent=1 // pred_check
      _
    $region51: #{tpu_custom_call.1} parent=1 // pred_check_branch
      %384 = sbr.rel (0) target = $region53
    $region52: #{tpu_custom_call.1} parent=1 // pred_region
      %385 = dma.done [#allocation5], 16
    $region53: #{tpu_custom_call.1} parent=1 // pred_fallthru
      _
    %386 = vsyncpa [#allocation4], 1
    %387 = vsyncpa [#allocation7], 1
    %388 = vsyncpa [#allocation5], 1

</llo_original>
